<compile_context>
chip_gen: v7x
topology: tpu7x:2x2x1
jax: 0.10.0
libtpu: 0.0.40
codegen_flags: <defaults>
</compile_context>

<pallas_src>
import functools
import math

import jax
import jax.numpy as jnp
from jax.experimental import pallas as pl
from jax.experimental.pallas import tpu as pltpu

_LANE = 128      # lane width: last dim of every block is a multiple of this
_SUBLANE = 8     # sublane width: batch tile is a multiple of this


def _round_up(x, m):
    return ((x + m - 1) // m) * m


def _fused_mlp2_kernel(x_ref, w1_ref, b1_ref, w2_ref, b2_ref, o_ref):
    # Layer 1: MXU matmul (bf16 operands, f32 accumulate) + f32 bias + ReLU (VPU).
    h = jnp.dot(x_ref[...], w1_ref[...], preferred_element_type=jnp.float32)
    h = jnp.maximum(h + b1_ref[...], 0.0)
    # Layer 2: hidden stays in vregs/VMEM; cast to bf16 only to feed the MXU again.
    h = h.astype(w2_ref.dtype)
    y = jnp.dot(h, w2_ref[...], preferred_element_type=jnp.float32)
    y = jnp.maximum(y + b2_ref[...], 0.0)   # ReLU after the final layer too (matches forward())
    o_ref[...] = y.astype(o_ref.dtype)


def init_linear_qnet_params(key, input_size, hidden_sizes, output_size,
                            param_dtype=jnp.bfloat16):
    """PyTorch-style uniform(-1/sqrt(fan_in), 1/sqrt(fan_in)) init, then zero-pad feature dims
    up to lane multiples (128) and store weights transposed vs. torch: y = x @ W + b."""
    sizes = len(hidden_sizes) + 1
    if sizes > 3:
        # TODO(synk): the PyTorch sizes>3 __init__ branch indexes hidden_sizes out of range;
        # only the well-defined 2-layer (sizes<=3) path is implemented here.
        raise NotImplementedError("Only the sizes<=3 (2-layer) Linear_QNet path is supported.")
    dims = [(input_size, hidden_sizes[0]), (hidden_sizes[0], output_size)]

    params = []
    for fan_in, fan_out in dims:
        key, kw, kb = jax.random.split(key, 3)
        bound = 1.0 / math.sqrt(fan_in)
        w = jax.random.uniform(kw, (fan_in, fan_out), jnp.float32, -bound, bound)
        b = jax.random.uniform(kb, (1, fan_out), jnp.float32, -bound, bound)
        kp = _round_up(fan_in, _LANE)
        np_ = _round_up(fan_out, _LANE)
        # Padded rows/cols are zero, so they contribute nothing to the matmuls and the padded
        # output columns are relu(0 + 0) = 0.
        w_p = jnp.zeros((kp, np_), param_dtype).at[:fan_in, :fan_out].set(w.astype(param_dtype))
        b_p = jnp.zeros((1, np_), jnp.float32).at[:, :fan_out].set(b)
        params.append((w_p, b_p))
    return params


def linear_qnet_forward(params, x, *, output_size, block_m=256):
    """Fused 2-layer forward: relu(relu(x @ W1 + b1) @ W2 + b2), one pallas_call."""
    (w1, b1), (w2, b2) = params
    m, k = x.shape
    kp, hp = w1.shape
    np_ = w2.shape[1]

    # Batch tile: up to 256 rows per grid step (mem-bound sweet spot), sublane-aligned.
    tm = block_m if m >= block_m else _round_up(m, _SUBLANE)
    mp = _round_up(m, tm)

    # Pad input to (mp, kp): extra rows/cols are zero and are sliced away below.
    x_p = jnp.zeros((mp, kp), w1.dtype).at[:m, :k].set(x.astype(w1.dtype))

    out = pl.pallas_call(
        _fused_mlp2_kernel,
        out_shape=jax.ShapeDtypeStruct((mp, np_), jnp.float32),
        grid=(mp // tm,),
        in_specs=[
            pl.BlockSpec((tm, kp), lambda i: (i, 0),
                         memory_space=pltpu.MemorySpace.VMEM),
            pl.BlockSpec((kp, hp), lambda i: (0, 0),
                         memory_space=pltpu.MemorySpace.VMEM),
            pl.BlockSpec((1, hp), lambda i: (0, 0),
                         memory_space=pltpu.MemorySpace.VMEM),
            pl.BlockSpec((hp, np_), lambda i: (0, 0),
                         memory_space=pltpu.MemorySpace.VMEM),
            pl.BlockSpec((1, np_), lambda i: (0, 0),
                         memory_space=pltpu.MemorySpace.VMEM),
        ],
        out_specs=pl.BlockSpec((tm, np_), lambda i: (i, 0),
                               memory_space=pltpu.MemorySpace.VMEM),
        compiler_params=pltpu.CompilerParams(
            dimension_semantics=("parallel",),      # v7x: split batch tiles across 2 TCs
            vmem_limit_bytes=64 * 1024 * 1024,      # explicit headroom; tiny at these sizes
        ),
    )(x_p, w1, b1, w2, b2)

    return out[:m, :output_size]


if __name__ == "__main__":
    key = jax.random.PRNGKey(0)
    batch, input_size, hidden_sizes, output_size = 8, 16, [32], 4

    kx, kparams = jax.random.split(key)
    x = jax.random.normal(kx, (batch, input_size), jnp.float32)
    params = init_linear_qnet_params(kparams, input_size, hidden_sizes, output_size)

    fwd = jax.jit(functools.partial(linear_qnet_forward, output_size=output_size))
    out = jax.block_until_ready(fwd(params, x))

    # Plain-JAX reference with the same bf16 operands / f32 accumulation as the kernel.
    (w1, b1), (w2, b2) = params
    w1_t = w1[:input_size, :hidden_sizes[0]]
    b1_t = b1[:, :hidden_sizes[0]]
    w2_t = w2[:hidden_sizes[0], :output_size]
    b2_t = b2[:, :output_size]
    h_ref = jnp.maximum(
        jnp.dot(x.astype(w1.dtype), w1_t, preferred_element_type=jnp.float32) + b1_t, 0.0)
    ref = jnp.maximum(
        jnp.dot(h_ref.astype(w2.dtype), w2_t, preferred_element_type=jnp.float32) + b2_t, 0.0)

    assert out.shape == (batch, output_size)
    assert jnp.allclose(out, ref, atol=1e-2, rtol=1e-2)

    print("KERNEL_OK")
</pallas_src>

<mosaic_0001>
module attributes {stable_mosaic.version = 11 : i64} {
  func.func @_fused_mlp2_kernel(%arg0: i32, %arg1: memref<8x128xbf16, #tpu.memory_space<vmem>>, %arg2: memref<128x128xbf16, #tpu.memory_space<vmem>>, %arg3: memref<1x128xf32, #tpu.memory_space<vmem>>, %arg4: memref<128x128xbf16, #tpu.memory_space<vmem>>, %arg5: memref<1x128xf32, #tpu.memory_space<vmem>>, %arg6: memref<8x128xf32, #tpu.memory_space<vmem>>) attributes {dimension_semantics = [#tpu.dimension_semantics<parallel>], iteration_bounds = array<i64: 1>, scalar_prefetch = 0 : i64, scratch_operands = 0 : i64, tpu.core_type = #tpu.core_type<tc>, window_params = [{transform_indices = @transform_0, window_bounds = array<i64: 8, 128>}, {pipeline_mode = #tpu.pipeline_mode<synchronous>, transform_indices = @transform_1, window_bounds = array<i64: 128, 128>}, {pipeline_mode = #tpu.pipeline_mode<synchronous>, transform_indices = @transform_2, window_bounds = array<i64: 1, 128>}, {pipeline_mode = #tpu.pipeline_mode<synchronous>, transform_indices = @transform_3, window_bounds = array<i64: 128, 128>}, {pipeline_mode = #tpu.pipeline_mode<synchronous>, transform_indices = @transform_4, window_bounds = array<i64: 1, 128>}, {transform_indices = @transform_5, window_bounds = array<i64: 8, 128>}]} {
    %c0 = arith.constant 0 : index
    %c0_0 = arith.constant 0 : index
    %0 = vector.load %arg1[%c0, %c0_0] : memref<8x128xbf16, #tpu.memory_space<vmem>>, vector<8x128xbf16>
    %c0_1 = arith.constant 0 : index
    %c0_2 = arith.constant 0 : index
    %1 = vector.load %arg2[%c0_1, %c0_2] : memref<128x128xbf16, #tpu.memory_space<vmem>>, vector<128x128xbf16>
    %cst = arith.constant dense<0.000000e+00> : vector<8x128xf32>
    %2 = tpu.matmul %0, %1, %cst {dimension_numbers = #tpu.dot_dimension_numbers<[1], [0], [0], [1], [0, 0, 1, 1], [], []>} : vector<8x128xbf16>, vector<128x128xbf16>, vector<8x128xf32> -> vector<8x128xf32>
    %c0_3 = arith.constant 0 : index
    %c0_4 = arith.constant 0 : index
    %3 = vector.load %arg3[%c0_3, %c0_4] : memref<1x128xf32, #tpu.memory_space<vmem>>, vector<1x128xf32>
    %4 = vector.broadcast %3 : vector<1x128xf32> to vector<8x128xf32>
    %5 = arith.addf %2, %4 : vector<8x128xf32>
    %cst_5 = arith.constant 0.000000e+00 : f32
    %6 = vector.broadcast %cst_5 : f32 to vector<8x128xf32>
    %7 = arith.maximumf %5, %6 : vector<8x128xf32>
    %8 = arith.truncf %7 : vector<8x128xf32> to vector<8x128xbf16>
    %c0_6 = arith.constant 0 : index
    %c0_7 = arith.constant 0 : index
    %9 = vector.load %arg4[%c0_6, %c0_7] : memref<128x128xbf16, #tpu.memory_space<vmem>>, vector<128x128xbf16>
    %cst_8 = arith.constant dense<0.000000e+00> : vector<8x128xf32>
    %10 = tpu.matmul %8, %9, %cst_8 {dimension_numbers = #tpu.dot_dimension_numbers<[1], [0], [0], [1], [0, 0, 1, 1], [], []>} : vector<8x128xbf16>, vector<128x128xbf16>, vector<8x128xf32> -> vector<8x128xf32>
    %c0_9 = arith.constant 0 : index
    %c0_10 = arith.constant 0 : index
    %11 = vector.load %arg5[%c0_9, %c0_10] : memref<1x128xf32, #tpu.memory_space<vmem>>, vector<1x128xf32>
    %12 = vector.broadcast %11 : vector<1x128xf32> to vector<8x128xf32>
    %13 = arith.addf %10, %12 : vector<8x128xf32>
    %cst_11 = arith.constant 0.000000e+00 : f32
    %14 = vector.broadcast %cst_11 : f32 to vector<8x128xf32>
    %15 = arith.maximumf %13, %14 : vector<8x128xf32>
    %c0_12 = arith.constant 0 : index
    %c0_13 = arith.constant 0 : index
    %16 = vector.load %arg6[%c0_12, %c0_13] : memref<8x128xf32, #tpu.memory_space<vmem>>, vector<8x128xf32>
    tpu.vector_store %arg6[%c0_12, %c0_13], %15 {strides = array<i32>} : memref<8x128xf32, #tpu.memory_space<vmem>>, vector<8x128xf32>,
    return
  }
  func.func @transform_0(%arg0: i32) -> (i32, i32) {
    %c0_i32 = arith.constant 0 : i32
    %c0_i32_0 = arith.constant 0 : i32
    return %arg0, %c0_i32 : i32, i32
  }
  func.func @transform_1(%arg0: i32) -> (i32, i32) {
    %c0_i32 = arith.constant 0 : i32
    %c0_i32_0 = arith.constant 0 : i32
    %c0_i32_1 = arith.constant 0 : i32
    return %c0_i32, %c0_i32_0 : i32, i32
  }
  func.func @transform_2(%arg0: i32) -> (i32, i32) {
    %c0_i32 = arith.constant 0 : i32
    %c0_i32_0 = arith.constant 0 : i32
    %c0_i32_1 = arith.constant 0 : i32
    return %c0_i32, %c0_i32_0 : i32, i32
  }
  func.func @transform_3(%arg0: i32) -> (i32, i32) {
    %c0_i32 = arith.constant 0 : i32
    %c0_i32_0 = arith.constant 0 : i32
    %c0_i32_1 = arith.constant 0 : i32
    return %c0_i32, %c0_i32_0 : i32, i32
  }
  func.func @transform_4(%arg0: i32) -> (i32, i32) {
    %c0_i32 = arith.constant 0 : i32
    %c0_i32_0 = arith.constant 0 : i32
    %c0_i32_1 = arith.constant 0 : i32
    return %c0_i32, %c0_i32_0 : i32, i32
  }
  func.func @transform_5(%arg0: i32) -> (i32, i32) {
    %c0_i32 = arith.constant 0 : i32
    %c0_i32_0 = arith.constant 0 : i32
    return %arg0, %c0_i32 : i32, i32
  }
}

</mosaic_0001>

<llo_original>
// kernel: linear_qnet_forward.1
$region0: #{linear_qnet_forward.1}
  #allocation0 [shape = 'u32[]', space=smem, size = 0x4, offset = 0x4, fixed_abs, tag = 'smem constant byte address 0x4 - core index']
  #allocation1 [shape = 'u32[144,128]{1,0:T(1,128)}', space=vmem, size = 0x12000, scoped, tag = 'internal scratch']
  %s0 = inlined_call_operand.hbm [shape: bf16[8,128], index: 0, kind: input, shape index: {}]
  %s1 = inlined_call_operand.hbm [shape: bf16[128,128], index: 1, kind: input, shape index: {}]
  %s2 = inlined_call_operand.hbm [shape: f32[1,128], index: 2, kind: input, shape index: {}]
  %s3 = inlined_call_operand.hbm [shape: bf16[128,128], index: 3, kind: input, shape index: {}]
  %s4 = inlined_call_operand.hbm [shape: f32[1,128], index: 4, kind: input, shape index: {}]
  %s5 = inlined_call_operand.hbm [shape: f32[8,128], index: 5, kind: output, shape index: {}]
  %s6 = sld [smem:[#allocation0]]
  $region50: #{linear_qnet_forward.1} parent=0
    _
  %s8 = ssub.s32 1, %s6
  %s9 = scalar_select 0, %s8, %s6
  $region1: #{linear_qnet_forward.1} parent=0
    #allocation2 [shape = 'u8[2048]{0}', space=vmem, size = 0x800, scoped, tag = 'input window, operand 0, single buffered']
    #allocation3 [shape = 's32[1]{0}', space=sflag, size = 0x4, scoped, tag = 'scoped memory for linear_qnet_forward.1']
    #allocation4 [shape = 's32[1]{0}', space=sflag, size = 0x4, scoped, tag = 'scoped memory for linear_qnet_forward.1']
    #allocation5 [shape = 'u8[32768]{0}', space=vmem, size = 0x8000, scoped, tag = 'input window, operand 1, single buffered']
    #allocation6 [shape = 's32[1]{0}', space=sflag, size = 0x4, scoped, tag = 'scoped memory for linear_qnet_forward.1']
    #allocation7 [shape = 'u8[512]{0}', space=vmem, size = 0x400, scoped, tag = 'input window, operand 2, single buffered']
    #allocation8 [shape = 'u8[32768]{0}', space=vmem, size = 0x8000, scoped, tag = 'input window, operand 3, single buffered']
    #allocation9 [shape = 's32[1]{0}', space=sflag, size = 0x4, scoped, tag = 'scoped memory for linear_qnet_forward.1']
    #allocation10 [shape = 'u8[512]{0}', space=vmem, size = 0x400, scoped, tag = 'input window, operand 4, single buffered']
    #allocation11 [shape = 'u8[4096]{0}', space=vmem, size = 0x1000, scoped, tag = 'output window, operand 0, single buffered']
    %10 = vsyncpa [#allocation3], 0
    %11 = vsyncpa [#allocation6], 0
    %12 = vsyncpa [#allocation9], 0
    %13 = vsyncpa [#allocation4], 0
    // Predicated region
    $region2: #{linear_qnet_forward.1} parent=1 // pred_check
      _
    $region3: #{linear_qnet_forward.1} parent=1 // pred_check_branch
      %15 = sbr.rel (0) target = $region5
    $region4: #{linear_qnet_forward.1} parent=1 // pred_region
      %s17 = ssub.s32 64, 64
      %18 = vsyncadd [#allocation3], %s17
      %s20 = sshll.u32 [#allocation2], 4
      %s21 = int_to_ptr.vmem [resolvable:$true] %s20
      %23 = dma.hbm_to_vmem [thread:$0]  %s0, 64, %s21, [#allocation3]
    $region5: #{linear_qnet_forward.1} parent=1 // pred_fallthru
      _
    // Predicated region
    $region6: #{linear_qnet_forward.1} parent=1 // pred_check
      _
    $region7: #{linear_qnet_forward.1} parent=1 // pred_check_branch
      %25 = sbr.rel (0) target = $region9
    $region8: #{linear_qnet_forward.1} parent=1 // pred_region
      %s27 = ssub.s32 1024, 1024
      %28 = vsyncadd [#allocation6], %s27
      %s29 = sshll.u32 [#allocation5], 4
      %s30 = int_to_ptr.vmem [resolvable:$true] %s29
      %35 = dma.hbm_to_vmem [thread:$0]  %s1, 1024, %s30, [#allocation6], 64, 64, 4
    $region9: #{linear_qnet_forward.1} parent=1 // pred_fallthru
      _
    // Predicated region
    $region10: #{linear_qnet_forward.1} parent=1 // pred_check
      _
    $region11: #{linear_qnet_forward.1} parent=1 // pred_check_branch
      %37 = sbr.rel (0) target = $region13
    $region12: #{linear_qnet_forward.1} parent=1 // pred_region
      %s39 = ssub.s32 16, 16
      %40 = vsyncadd [#allocation6], %s39
      %s42 = sshll.u32 [#allocation7], 4
      %s43 = int_to_ptr.vmem [resolvable:$true] %s42
      %45 = dma.hbm_to_vmem [thread:$0]  %s2, 16, %s43, [#allocation6]
    $region13: #{linear_qnet_forward.1} parent=1 // pred_fallthru
      _
    // Predicated region
    $region14: #{linear_qnet_forward.1} parent=1 // pred_check
      _
    $region15: #{linear_qnet_forward.1} parent=1 // pred_check_branch
      %47 = sbr.rel (0) target = $region17
    $region16: #{linear_qnet_forward.1} parent=1 // pred_region
      %s49 = ssub.s32 1024, 1024
      %50 = vsyncadd [#allocation9], %s49
      %s51 = sshll.u32 [#allocation8], 4
      %s52 = int_to_ptr.vmem [resolvable:$true] %s51
      %57 = dma.hbm_to_vmem [thread:$0]  %s3, 1024, %s52, [#allocation9], 64, 64, 4
    $region17: #{linear_qnet_forward.1} parent=1 // pred_fallthru
      _
    // Predicated region
    $region18: #{linear_qnet_forward.1} parent=1 // pred_check
      _
    $region19: #{linear_qnet_forward.1} parent=1 // pred_check_branch
      %59 = sbr.rel (0) target = $region21
    $region20: #{linear_qnet_forward.1} parent=1 // pred_region
      %s61 = ssub.s32 16, 16
      %62 = vsyncadd [#allocation9], %s61
      %s64 = sshll.u32 [#allocation10], 4
      %s65 = int_to_ptr.vmem [resolvable:$true] %s64
      %67 = dma.hbm_to_vmem [thread:$0]  %s4, 16, %s65, [#allocation9]
    $region21: #{linear_qnet_forward.1} parent=1 // pred_fallthru
      _
    // Predicated region
    $region22: #{linear_qnet_forward.1} parent=1 // pred_check
      _
    $region23: #{linear_qnet_forward.1} parent=1 // pred_check_branch
      %69 = sbr.rel (0) target = $region25
    $region24: #{linear_qnet_forward.1} parent=1 // pred_region
      %70 = dma.done [#allocation3], 64
    $region25: #{linear_qnet_forward.1} parent=1 // pred_fallthru
      _
    // Predicated region
    $region26: #{linear_qnet_forward.1} parent=1 // pred_check
      _
    $region27: #{linear_qnet_forward.1} parent=1 // pred_check_branch
      %72 = sbr.rel (0) target = $region29
    $region28: #{linear_qnet_forward.1} parent=1 // pred_region
      %73 = dma.done [#allocation6], 1024
    $region29: #{linear_qnet_forward.1} parent=1 // pred_fallthru
      _
    // Predicated region
    $region30: #{linear_qnet_forward.1} parent=1 // pred_check
      _
    $region31: #{linear_qnet_forward.1} parent=1 // pred_check_branch
      %75 = sbr.rel (0) target = $region33
    $region32: #{linear_qnet_forward.1} parent=1 // pred_region
      %76 = dma.done [#allocation6], 16
    $region33: #{linear_qnet_forward.1} parent=1 // pred_fallthru
      _
    // Predicated region
    $region34: #{linear_qnet_forward.1} parent=1 // pred_check
      _
    $region35: #{linear_qnet_forward.1} parent=1 // pred_check_branch
      %78 = sbr.rel (0) target = $region37
    $region36: #{linear_qnet_forward.1} parent=1 // pred_region
      %79 = dma.done [#allocation9], 1024
    $region37: #{linear_qnet_forward.1} parent=1 // pred_fallthru
      _
    // Predicated region
    $region38: #{linear_qnet_forward.1} parent=1 // pred_check
      _
    $region39: #{linear_qnet_forward.1} parent=1 // pred_check_branch
      %81 = sbr.rel (0) target = $region41
    $region40: #{linear_qnet_forward.1} parent=1 // pred_region
      %82 = dma.done [#allocation9], 16
    $region41: #{linear_qnet_forward.1} parent=1 // pred_fallthru
      _
    %v84 = vld [vmem:[#allocation2] sm:$0xf]
    %v85 = vld [vmem:[#allocation5] sm:$0xf]
    %v86 = vld [vmem:[#allocation5 + $0x4] sm:$0xf]
    %v87 = vld [vmem:[#allocation5 + $0x8] sm:$0xf]
    %v88 = vld [vmem:[#allocation5 + $0xc] sm:$0xf]
    %v89 = vld [vmem:[#allocation5 + $0x10] sm:$0xf]
    %v90 = vld [vmem:[#allocation5 + $0x14] sm:$0xf]
    %v91 = vld [vmem:[#allocation5 + $0x18] sm:$0xf]
    %v92 = vld [vmem:[#allocation5 + $0x1c] sm:$0xf]
    %v93 = vld [vmem:[#allocation5 + $0x20] sm:$0xf]
    %v94 = vld [vmem:[#allocation5 + $0x24] sm:$0xf]
    %v95 = vld [vmem:[#allocation5 + $0x28] sm:$0xf]
    %v96 = vld [vmem:[#allocation5 + $0x2c] sm:$0xf]
    %v97 = vld [vmem:[#allocation5 + $0x30] sm:$0xf]
    %v98 = vld [vmem:[#allocation5 + $0x34] sm:$0xf]
    %v99 = vld [vmem:[#allocation5 + $0x38] sm:$0xf]
    %v100 = vld [vmem:[#allocation5 + $0x3c] sm:$0xf]
    %v101 = vld [vmem:[#allocation7] sm:$0x1]
    %v103 = vlaneseq
    %v104 = vshrl.u32 %v103, 7
    %v105 = vsub.s32 0, %v104
    %v106 = vrot.slane %v101, %v105
    %v124 = vunpack.c.l.b16 %v85
    %v125 = vunpack.c.l.b16 %v86
    %v126 = vunpack.c.l.b16 %v87
    %v127 = vunpack.c.l.b16 %v88
    %v128 = vunpack.c.l.b16 %v89
    %v129 = vunpack.c.l.b16 %v90
    %v130 = vunpack.c.l.b16 %v91
    %v131 = vunpack.c.l.b16 %v92
    %v132 = vunpack.c.l.b16 %v93
    %v133 = vunpack.c.l.b16 %v94
    %v134 = vunpack.c.l.b16 %v95
    %v135 = vunpack.c.l.b16 %v96
    %v136 = vunpack.c.l.b16 %v97
    %v137 = vunpack.c.l.b16 %v98
    %v138 = vunpack.c.l.b16 %v99
    %v139 = vunpack.c.l.b16 %v100
    %v140 = vpack.c.b16 %v125, %v124
    %v141 = vpack.c.b16 %v127, %v126
    %v142 = vpack.c.b16 %v129, %v128
    %v143 = vpack.c.b16 %v131, %v130
    %v144 = vpack.c.b16 %v133, %v132
    %v145 = vpack.c.b16 %v135, %v134
    %v146 = vpack.c.b16 %v137, %v136
    %v147 = vpack.c.b16 %v139, %v138
    %156 = vmatprep.subr.bf16.mxu0 0
    %157 = vmatpush1.bf16.msra.mxu0 %v140
    %158 = vmatprep.subr.bf16.mxu0 0
    %159 = vmatpush1.bf16.msra.mxu0 %v141
    %160 = vmatprep.subr.bf16.mxu0 0
    %161 = vmatpush1.bf16.msra.mxu0 %v142
    %162 = vmatprep.subr.bf16.mxu0 0
    %163 = vmatpush1.bf16.msra.mxu0 %v143
    %164 = vmatprep.subr.bf16.mxu0 0
    %165 = vmatpush1.bf16.msra.mxu0 %v144
    %166 = vmatprep.subr.bf16.mxu0 0
    %167 = vmatpush1.bf16.msra.mxu0 %v145
    %168 = vmatprep.subr.bf16.mxu0 0
    %169 = vmatpush1.bf16.msra.mxu0 %v146
    %170 = vmatprep.subr.bf16.mxu0 0
    %171 = vmatpush1.bf16.msra.mxu0 %v147
    %172 = vmatprep.subr.bf16.mxu0 0
    %173 = vmatpush1.bf16.msra.mxu0 0
    %174 = vmatprep.subr.bf16.mxu0 0
    %175 = vmatpush1.bf16.msra.mxu0 0
    %176 = vmatprep.subr.bf16.mxu0 0
    %177 = vmatpush1.bf16.msra.mxu0 0
    %178 = vmatprep.subr.bf16.mxu0 0
    %179 = vmatpush1.bf16.msra.mxu0 0
    %180 = vmatprep.subr.bf16.mxu0 0
    %181 = vmatpush1.bf16.msra.mxu0 0
    %182 = vmatprep.subr.bf16.mxu0 0
    %183 = vmatpush1.bf16.msra.mxu0 0
    %184 = vmatprep.subr.bf16.mxu0 0
    %185 = vmatpush1.bf16.msra.mxu0 0
    %186 = vmatprep.subr.bf16.mxu0 0
    %187 = vmatpush1.bf16.msra.mxu0 0
    %188 = vmatprep.mubr.bf16.mxu0 0
    %189 = vmatmul.mubr.bf16.gmra.mrb[0].mxu0 %v84
    %v190 = vpop.f32.mrb[0].mxu0
    %v191 = vadd.f32 %v106, %v190
    %v192 = vpop.f32.mrb[0].mxu0
    %v193 = vpop.f32.mrb[0].mxu0
    %v194 = vpop.f32.mrb[0].mxu0
    %195 = vdwg.mxu0
    %v196 = vmax.f32 %v191, 0.0
    %v197 = vpack.c.bf16 %v196, %v196
    %v198 = vld [vmem:[#allocation8] sm:$0xf]
    %v199 = vld [vmem:[#allocation8 + $0x4] sm:$0xf]
    %v200 = vld [vmem:[#allocation8 + $0x8] sm:$0xf]
    %v201 = vld [vmem:[#allocation8 + $0xc] sm:$0xf]
    %v202 = vld [vmem:[#allocation8 + $0x10] sm:$0xf]
    %v203 = vld [vmem:[#allocation8 + $0x14] sm:$0xf]
    %v204 = vld [vmem:[#allocation8 + $0x18] sm:$0xf]
    %v205 = vld [vmem:[#allocation8 + $0x1c] sm:$0xf]
    %v206 = vld [vmem:[#allocation8 + $0x20] sm:$0xf]
    %v207 = vld [vmem:[#allocation8 + $0x24] sm:$0xf]
    %v208 = vld [vmem:[#allocation8 + $0x28] sm:$0xf]
    %v209 = vld [vmem:[#allocation8 + $0x2c] sm:$0xf]
    %v210 = vld [vmem:[#allocation8 + $0x30] sm:$0xf]
    %v211 = vld [vmem:[#allocation8 + $0x34] sm:$0xf]
    %v212 = vld [vmem:[#allocation8 + $0x38] sm:$0xf]
    %v213 = vld [vmem:[#allocation8 + $0x3c] sm:$0xf]
    %v214 = vld [vmem:[#allocation10] sm:$0x1]
    %v216 = vlaneseq
    %v217 = vshrl.u32 %v216, 7
    %v218 = vsub.s32 0, %v217
    %v219 = vrot.slane %v214, %v218
    %v237 = vunpack.c.l.b16 %v198
    %v238 = vunpack.c.l.b16 %v199
    %v239 = vunpack.c.l.b16 %v200
    %v240 = vunpack.c.l.b16 %v201
    %v241 = vunpack.c.l.b16 %v202
    %v242 = vunpack.c.l.b16 %v203
    %v243 = vunpack.c.l.b16 %v204
    %v244 = vunpack.c.l.b16 %v205
    %v245 = vunpack.c.l.b16 %v206
    %v246 = vunpack.c.l.b16 %v207
    %v247 = vunpack.c.l.b16 %v208
    %v248 = vunpack.c.l.b16 %v209
    %v249 = vunpack.c.l.b16 %v210
    %v250 = vunpack.c.l.b16 %v211
    %v251 = vunpack.c.l.b16 %v212
    %v252 = vunpack.c.l.b16 %v213
    %v253 = vpack.c.b16 %v238, %v237
    %v254 = vpack.c.b16 %v240, %v239
    %v255 = vpack.c.b16 %v242, %v241
    %v256 = vpack.c.b16 %v244, %v243
    %v257 = vpack.c.b16 %v246, %v245
    %v258 = vpack.c.b16 %v248, %v247
    %v259 = vpack.c.b16 %v250, %v249
    %v260 = vpack.c.b16 %v252, %v251
    %269 = vmatprep.subr.bf16.mxu0 0
    %270 = vmatpush1.bf16.msra.mxu0 %v253
    %271 = vmatprep.subr.bf16.mxu0 0
    %272 = vmatpush1.bf16.msra.mxu0 %v254
    %273 = vmatprep.subr.bf16.mxu0 0
    %274 = vmatpush1.bf16.msra.mxu0 %v255
    %275 = vmatprep.subr.bf16.mxu0 0
    %276 = vmatpush1.bf16.msra.mxu0 %v256
    %277 = vmatprep.subr.bf16.mxu0 0
    %278 = vmatpush1.bf16.msra.mxu0 %v257
    %279 = vmatprep.subr.bf16.mxu0 0
    %280 = vmatpush1.bf16.msra.mxu0 %v258
    %281 = vmatprep.subr.bf16.mxu0 0
    %282 = vmatpush1.bf16.msra.mxu0 %v259
    %283 = vmatprep.subr.bf16.mxu0 0
    %284 = vmatpush1.bf16.msra.mxu0 %v260
    %285 = vmatprep.subr.bf16.mxu0 0
    %286 = vmatpush1.bf16.msra.mxu0 0
    %287 = vmatprep.subr.bf16.mxu0 0
    %288 = vmatpush1.bf16.msra.mxu0 0
    %289 = vmatprep.subr.bf16.mxu0 0
    %290 = vmatpush1.bf16.msra.mxu0 0
    %291 = vmatprep.subr.bf16.mxu0 0
    %292 = vmatpush1.bf16.msra.mxu0 0
    %293 = vmatprep.subr.bf16.mxu0 0
    %294 = vmatpush1.bf16.msra.mxu0 0
    %295 = vmatprep.subr.bf16.mxu0 0
    %296 = vmatpush1.bf16.msra.mxu0 0
    %297 = vmatprep.subr.bf16.mxu0 0
    %298 = vmatpush1.bf16.msra.mxu0 0
    %299 = vmatprep.subr.bf16.mxu0 0
    %300 = vmatpush1.bf16.msra.mxu0 0
    %301 = vmatprep.mubr.bf16.mxu0 0
    %302 = vmatmul.mubr.bf16.gmra.mrb[0].mxu0 %v197
    %v303 = vpop.f32.mrb[0].mxu0
    %v304 = vadd.f32 %v219, %v303
    %v305 = vpop.f32.mrb[0].mxu0
    %v306 = vpop.f32.mrb[0].mxu0
    %v307 = vpop.f32.mrb[0].mxu0
    %308 = vdwg.mxu0
    %v309 = vmax.f32 %v304, 0.0
    %310 = vst [vmem:[#allocation11] sm:$0xff] %v309
    // Predicated region
    $region42: #{linear_qnet_forward.1} parent=1 // pred_check
      _
    $region43: #{linear_qnet_forward.1} parent=1 // pred_check_branch
      %312 = sbr.rel (0) target = $region45
    $region44: #{linear_qnet_forward.1} parent=1 // pred_region
      %s314 = ssub.s32 128, 128
      %315 = vsyncadd [#allocation4], %s314
      %s317 = sshll.u32 [#allocation11], 4
      %s318 = int_to_ptr.vmem [resolvable:$true] %s317
      %320 = dma.vmem_to_hbm [thread:$0]  %s318, 128, %s5, [#allocation4]
    $region45: #{linear_qnet_forward.1} parent=1 // pred_fallthru
      _
    // Predicated region
    $region46: #{linear_qnet_forward.1} parent=1 // pred_check
      _
    $region47: #{linear_qnet_forward.1} parent=1 // pred_check_branch
      %322 = sbr.rel (0) target = $region49
    $region48: #{linear_qnet_forward.1} parent=1 // pred_region
      %323 = dma.done [#allocation4], 128
    $region49: #{linear_qnet_forward.1} parent=1 // pred_fallthru
      _
    %324 = vsyncpa [#allocation3], 1
    %325 = vsyncpa [#allocation6], 1
    %326 = vsyncpa [#allocation9], 1
    %327 = vsyncpa [#allocation4], 1

</llo_original>
